<compile_context>
chip_gen: v6e
topology: v6e:2x2x1
jax: 0.10.0
libtpu: 0.0.40
codegen_flags: <defaults>
</compile_context>

<pallas_src>
import functools
import math

import jax
import jax.numpy as jnp
from jax.experimental import pallas as pl
from jax.experimental.pallas import tpu as pltpu


def _round_up(x, m):
    return ((x + m - 1) // m) * m


@functools.lru_cache(maxsize=None)
def _vmem_capacity_bytes():
    """Physical VMEM per core; conservative fallback if the query fails."""
    try:
        info = pltpu.get_tpu_info()
        cap = getattr(info, "vmem_capacity_bytes", None)
        if cap:
            return int(cap)
    except Exception:
        pass
    return 64 * 1024 * 1024  # safe on every generation (v7x physical size)


def _pick_tile(extent, target, unit):
    """Largest multiple of `unit` <= target that splits `extent` (rounded up
    to `unit`) with minimal padding; prefers an exact divisor (zero pad)."""
    extent_a = _round_up(max(extent, 1), unit)
    t_max = min(_round_up(target, unit), extent_a)
    best_t, best_pad = unit, None
    t = t_max
    while t >= unit:
        pad = _round_up(extent_a, t) - extent_a
        if pad == 0:
            return t
        if best_pad is None or pad < best_pad:
            best_t, best_pad = t, pad
        t -= unit
    return best_t


# ---------------------------------------------------------------------------
# Kernels
# ---------------------------------------------------------------------------
def _tl_kernel_single_k(x_ref, w_ref, o_ref, *, cast_dtype):
    """Whole contraction dim in one step: MXU result written directly."""
    x = x_ref[...]
    w = w_ref[...]
    if cast_dtype is not None:
        # In-kernel cast: VPU work hidden under the MXU, f32 accumulation.
        x = x.astype(cast_dtype)
        w = w.astype(cast_dtype)
    o_ref[...] = jnp.dot(x, w, preferred_element_type=jnp.float32).astype(
        o_ref.dtype
    )


def _tl_kernel_acc_k(x_ref, w_ref, o_ref, acc_ref, *, cast_dtype):
    """Tiled contraction dim: accumulate one (tm, tn) tile in f32 VMEM."""
    @pl.when(pl.program_id(2) == 0)
    def _():
        acc_ref[...] = jnp.zeros_like(acc_ref)

    x = x_ref[...]
    w = w_ref[...]
    if cast_dtype is not None:
        x = x.astype(cast_dtype)
        w = w.astype(cast_dtype)
    acc_ref[...] += jnp.dot(x, w, preferred_element_type=jnp.float32)

    @pl.when(pl.program_id(2) == pl.num_programs(2) - 1)
    def _():
        o_ref[...] = acc_ref[...].astype(o_ref.dtype)


# ---------------------------------------------------------------------------
# Wrapper
# ---------------------------------------------------------------------------
@functools.partial(
    jax.jit,
    static_argnames=(
        "tm",
        "tn",
        "tk",
        "use_bf16_mxu",
        "max_single_pass_k",
        "weight_resident_bytes",
        "vmem_limit_bytes",
    ),
)
def transposed_linear(
    x,
    weight,
    *,
    tm=512,
    tn=512,
    tk=1024,
    use_bf16_mxu=True,             # cast f32 -> bf16 inside the kernel (f32 acc)
    max_single_pass_k=2048,        # collapse the K grid axis up to this K
    weight_resident_bytes=None,    # defaults to vmem_limit // 3
    vmem_limit_bytes=None,         # defaults to ~75% of physical VMEM
):
    """Pallas equivalent of TransposedLinear.forward: x @ weight."""
    in_features, out_features = weight.shape
    assert x.shape[-1] == in_features

    out_dtype = x.dtype
    lead_shape = x.shape[:-1]
    M = math.prod(lead_shape) if lead_shape else 1

    if M == 0 or in_features == 0 or out_features == 0:
        return jnp.zeros((*lead_shape, out_features), dtype=out_dtype)

    # ---- generation-aware VMEM / residency budgets --------------------------
    if vmem_limit_bytes is None:
        vmem_limit_bytes = int(0.75 * _vmem_capacity_bytes())
    if weight_resident_bytes is None:
        weight_resident_bytes = vmem_limit_bytes // 3

    x_item = jnp.dtype(x.dtype).itemsize
    w_item = jnp.dtype(weight.dtype).itemsize
    o_item = jnp.dtype(out_dtype).itemsize

    cast_dtype = (
        jnp.bfloat16
        if (use_bf16_mxu and x.dtype == jnp.float32 and weight.dtype == jnp.float32)
        else None
    )
    # TODO(synk): wrapper-side pre-cast (f32->bf16) of an operand the kernel
    # re-streams >=3x would halve its HBM traffic; skipped to avoid the extra
    # pre-pass for the common resident / low-restream cases.

    sublane_mult = 16 if (cast_dtype is not None or x_item == 2) else 8

    x2d = x.reshape(M, in_features)

    # ---- tile selection (lane=128, sublane=8/16 alignment) ------------------
    K_aligned = _round_up(in_features, 128)
    N_aligned = _round_up(out_features, 128)

    single_k = K_aligned <= max_single_pass_k
    tk_eff = K_aligned if single_k else _pick_tile(in_features, tk, 128)

    tm_eff = _pick_tile(M, tm, sublane_mult)

    w_full_bytes = K_aligned * N_aligned * w_item
    weight_resident = single_k and (w_full_bytes <= weight_resident_bytes)
    tn_eff = N_aligned if weight_resident else _pick_tile(out_features, tn, 128)

    # ---- keep the (double-buffered) working set inside the VMEM budget ------
    def _footprint(tm_, tn_, tk_):
        bufs = 2 * (tm_ * tk_ * x_item + tk_ * tn_ * w_item + tm_ * tn_ * o_item)
        acc = 0 if single_k else tm_ * tn_ * 4
        return bufs + acc

    budget = int(0.88 * vmem_limit_bytes)
    while _footprint(tm_eff, tn_eff, tk_eff) > budget:
        candidates = []
        if tm_eff > sublane_mult:
            candidates.append(("tm", tm_eff))
        if (not single_k) and tk_eff > 128:
            candidates.append(("tk", tk_eff))
        if tn_eff > 128:
            # de-prioritize shrinking a fully-resident weight tile
            candidates.append(("tn", tn_eff // 4 if weight_resident else tn_eff))
        if not candidates:
            break
        which = max(candidates, key=lambda c: c[1])[0]
        if which == "tm":
            tm_eff = max(sublane_mult, _round_up(tm_eff // 2, sublane_mult))
        elif which == "tk":
            tk_eff = max(128, _round_up(tk_eff // 2, 128))
        else:
            tn_eff = max(128, _round_up(tn_eff // 2, 128))
            weight_resident = weight_resident and tn_eff >= N_aligned

    M_pad = _round_up(M, tm_eff)
    K_pad = _round_up(in_features, tk_eff)
    N_pad = _round_up(out_features, tn_eff)
    gm, gn = M_pad // tm_eff, N_pad // tn_eff

    # ---- guarantee >= 2 parallel blocks (v7x: 2 TensorCores per chip) -------
    if gm * gn == 1:
        n_blocks = N_pad // 128
        m_blocks = M_pad // sublane_mult
        if n_blocks >= 2:
            tn_eff = 128 * (n_blocks // 2) if n_blocks % 2 == 0 else 128
        elif m_blocks >= 2:
            tm_eff = sublane_mult * max(1, m_blocks // 2)
        M_pad = _round_up(M, tm_eff)
        N_pad = _round_up(out_features, tn_eff)
        gm, gn = M_pad // tm_eff, N_pad // tn_eff

    # ---- pad ragged extents only when actually needed (exact for matmul) ----
    if (M_pad, K_pad) != (M, in_features):
        x2d = jnp.pad(x2d, ((0, M_pad - M), (0, K_pad - in_features)))
    if (K_pad, N_pad) != (in_features, out_features):
        weight = jnp.pad(
            weight, ((0, K_pad - in_features), (0, N_pad - out_features))
        )

    if single_k:
        kernel = functools.partial(_tl_kernel_single_k, cast_dtype=cast_dtype)
        # Pick the grid order that minimizes HBM re-streaming:
        #   x-stationary  (gm outer): x read once,   weight read gm times
        #   w-stationary  (gn outer): weight read once, x read gn times
        x_stat_traffic = M_pad * K_pad * x_item + gm * K_pad * N_pad * w_item
        w_stat_traffic = gn * M_pad * K_pad * x_item + K_pad * N_pad * w_item
        swap = gm > 1 and gn > 1 and w_stat_traffic < x_stat_traffic
        if swap:
            grid = (gn, gm)
            x_map = lambda j, i: (i, 0)
            w_map = lambda j, i: (0, j)
            o_map = lambda j, i: (i, j)
        else:
            grid = (gm, gn)
            x_map = lambda i, j: (i, 0)
            w_map = lambda i, j: (0, j)
            o_map = lambda i, j: (i, j)

        out2d = pl.pallas_call(
            kernel,
            out_shape=jax.ShapeDtypeStruct((M_pad, N_pad), out_dtype),
            grid_spec=pltpu.PrefetchScalarGridSpec(
                num_scalar_prefetch=0,
                grid=grid,
                in_specs=[
                    pl.BlockSpec((tm_eff, K_pad), x_map),
                    pl.BlockSpec((K_pad, tn_eff), w_map),
                ],
                out_specs=pl.BlockSpec((tm_eff, tn_eff), o_map),
            ),
            compiler_params=pltpu.CompilerParams(
                dimension_semantics=("parallel", "parallel"),
                vmem_limit_bytes=vmem_limit_bytes,
            ),
        )(x2d, weight)
    else:
        kernel = functools.partial(_tl_kernel_acc_k, cast_dtype=cast_dtype)
        gk = K_pad // tk_eff
        # TODO(synk): if v5e profiling shows exposed per-K-step DMA, add
        # pipeline_mode=pl.Buffered(3) to the streamed x / weight BlockSpecs.
        out2d = pl.pallas_call(
            kernel,
            out_shape=jax.ShapeDtypeStruct((M_pad, N_pad), out_dtype),
            grid_spec=pltpu.PrefetchScalarGridSpec(
                num_scalar_prefetch=0,
                grid=(gm, gn, gk),
                in_specs=[
                    pl.BlockSpec((tm_eff, tk_eff), lambda i, j, k: (i, k)),
                    pl.BlockSpec((tk_eff, tn_eff), lambda i, j, k: (k, j)),
                ],
                out_specs=pl.BlockSpec((tm_eff, tn_eff), lambda i, j, k: (i, j)),
                scratch_shapes=[pltpu.VMEM((tm_eff, tn_eff), jnp.float32)],
            ),
            compiler_params=pltpu.CompilerParams(
                dimension_semantics=("parallel", "parallel", "arbitrary"),
                vmem_limit_bytes=vmem_limit_bytes,
            ),
        )(x2d, weight)

    out2d = out2d[:M, :out_features]
    return out2d.reshape(*lead_shape, out_features)


if __name__ == "__main__":
    key = jax.random.PRNGKey(0)

    def ref(x, w):
        return jnp.einsum(
            "...i,io->...o",
            x.astype(jnp.float32),
            w.astype(jnp.float32),
            precision=jax.lax.Precision.HIGHEST,
        )

    # Integer-valued f32 inputs make bf16-in / f32-accumulate matmuls exact,
    # giving an airtight correctness check on every code path.
    def int_valued(k, shape, lo=-4, hi=4):
        return jax.random.randint(k, shape, lo, hi + 1).astype(jnp.float32)

    k1, k2, k3, k4, k5, k6, k7, k8 = jax.random.split(key, 8)

    # Case 1: aligned shapes -> single-K, resident-weight path (default bf16).
    x1 = int_valued(k1, (2, 64, 128))
    w1 = int_valued(k2, (128, 256), -2, 2)
    o1 = jax.block_until_ready(transposed_linear(x1, w1))
    assert o1.shape == (2, 64, 256)
    assert jnp.allclose(o1, ref(x1, w1), atol=1e-5), "case 1 mismatch"

    # Case 2: ragged shapes exercising the padding path.
    x2 = int_valued(k3, (2, 50, 96))
    w2 = int_valued(k4, (96, 200), -2, 2)
    o2 = jax.block_until_ready(transposed_linear(x2, w2))
    assert o2.shape == (2, 50, 200)
    assert jnp.allclose(o2, ref(x2, w2), atol=1e-5), "case 2 mismatch"

    # Case 3: force the K-accumulation (3-D grid) path.
    x3 = int_valued(k5, (1, 64, 256))
    w3 = int_valued(k6, (256, 128), -2, 2)
    o3 = jax.block_until_ready(
        transposed_linear(x3, w3, tk=128, max_single_pass_k=64)
    )
    assert o3.shape == (1, 64, 128)
    assert jnp.allclose(o3, ref(x3, w3), atol=1e-5), "case 3 mismatch"

    # Case 4: real-valued data — exact f32 MXU path and default bf16 path.
    x4 = jax.random.normal(k7, (2, 64, 128), dtype=jnp.float32)
    w4 = jax.random.normal(k8, (128, 256), dtype=jnp.float32) * 0.02
    r4 = ref(x4, w4)
    o4_f32 = jax.block_until_ready(transposed_linear(x4, w4, use_bf16_mxu=False))
    o4_bf16 = jax.block_until_ready(transposed_linear(x4, w4))
    assert jnp.allclose(o4_f32, r4, atol=1e-2, rtol=1e-2), "case 4 f32 mismatch"
    assert jnp.allclose(o4_bf16, r4, atol=5e-2, rtol=5e-2), "case 4 bf16 mismatch"

    print("KERNEL_OK")
</pallas_src>

<mosaic_0001>
module attributes {stable_mosaic.version = 11 : i64} {
  func.func @_tl_kernel_single_k(%arg0: i32, %arg1: i32, %arg2: memref<128x128xf32, #tpu.memory_space<vmem>>, %arg3: memref<128x128xf32, #tpu.memory_space<vmem>>, %arg4: memref<128x128xf32, #tpu.memory_space<vmem>>) attributes {dimension_semantics = [#tpu.dimension_semantics<parallel>, #tpu.dimension_semantics<parallel>], iteration_bounds = array<i64: 1, 2>, scalar_prefetch = 0 : i64, scratch_operands = 0 : i64, tpu.core_type = #tpu.core_type<tc>, window_params = [{transform_indices = @transform_0, window_bounds = array<i64: 128, 128>}, {transform_indices = @transform_1, window_bounds = array<i64: 128, 128>}, {transform_indices = @transform_2, window_bounds = array<i64: 128, 128>}]} {
    %c0 = arith.constant 0 : index
    %c0_0 = arith.constant 0 : index
    %0 = vector.load %arg2[%c0, %c0_0] : memref<128x128xf32, #tpu.memory_space<vmem>>, vector<128x128xf32>
    %c0_1 = arith.constant 0 : index
    %c0_2 = arith.constant 0 : index
    %1 = vector.load %arg3[%c0_1, %c0_2] : memref<128x128xf32, #tpu.memory_space<vmem>>, vector<128x128xf32>
    %2 = arith.truncf %0 : vector<128x128xf32> to vector<128x128xbf16>
    %3 = arith.truncf %1 : vector<128x128xf32> to vector<128x128xbf16>
    %cst = arith.constant dense<0.000000e+00> : vector<128x128xf32>
    %4 = tpu.matmul %2, %3, %cst {dimension_numbers = #tpu.dot_dimension_numbers<[1], [0], [0], [1], [0, 0, 1, 1], [], []>} : vector<128x128xbf16>, vector<128x128xbf16>, vector<128x128xf32> -> vector<128x128xf32>
    %c0_3 = arith.constant 0 : index
    %c0_4 = arith.constant 0 : index
    %5 = vector.load %arg4[%c0_3, %c0_4] : memref<128x128xf32, #tpu.memory_space<vmem>>, vector<128x128xf32>
    tpu.vector_store %arg4[%c0_3, %c0_4], %4 {strides = array<i32>} : memref<128x128xf32, #tpu.memory_space<vmem>>, vector<128x128xf32>,
    return
  }
  func.func @transform_0(%arg0: i32, %arg1: i32) -> (i32, i32) {
    %c0_i32 = arith.constant 0 : i32
    %c0_i32_0 = arith.constant 0 : i32
    return %arg0, %c0_i32 : i32, i32
  }
  func.func @transform_1(%arg0: i32, %arg1: i32) -> (i32, i32) {
    %c0_i32 = arith.constant 0 : i32
    %c0_i32_0 = arith.constant 0 : i32
    return %c0_i32, %arg1 : i32, i32
  }
  func.func @transform_2(%arg0: i32, %arg1: i32) -> (i32, i32) {
    %c0_i32 = arith.constant 0 : i32
    return %arg0, %arg1 : i32, i32
  }
}

</mosaic_0001>

<llo_original>
// kernel: transposed_linear.1
$region0: #{transposed_linear.1}
  #allocation0 [shape = 'u32[]', space=smem, size = 0x4, offset = 0x4, fixed_abs, tag = 'smem constant byte address 0x4 - core index']
  #allocation1 [shape = 'u32[144,128]{1,0:T(1,128)}', space=vmem, size = 0x12000, scoped, tag = 'internal scratch']
  %s0 = inlined_call_operand.hbm [shape: f32[128,128], index: 0, kind: input, shape index: {}]
  %s1 = inlined_call_operand.hbm [shape: f32[128,256], index: 1, kind: input, shape index: {}]
  %s2 = inlined_call_operand.hbm [shape: f32[128,256], index: 2, kind: output, shape index: {}]
  %s3 = sld [smem:[#allocation0]]
  $region49: #{transposed_linear.1} parent=0
    _
  %s5 = ssub.s32 1, %s3
  %s6 = scalar_select 0, %s5, %s3
  $region1: #{transposed_linear.1} parent=0
    #allocation2 [shape = 'u8[65536]{0}', space=vmem, size = 0x10000, scoped, tag = 'input window, operand 0, single buffered']
    #allocation3 [shape = 's32[2]{0}', space=sflag, size = 0x8, scoped, tag = 'scoped memory for transposed_linear.1']
    #allocation4 [shape = 's32[2]{0}', space=sflag, size = 0x8, scoped, tag = 'scoped memory for transposed_linear.1']
    #allocation5 [shape = 'u8[131072]{0}', space=vmem, size = 0x20000, scoped, tag = 'input window, operand 1']
    #allocation6 [shape = 's32[2]{0}', space=sflag, size = 0x8, scoped, tag = 'scoped memory for transposed_linear.1']
    #allocation7 [shape = 'u8[131072]{0}', space=vmem, size = 0x20000, scoped, tag = 'output window, operand 0']
    %7 = vsyncpa [#allocation3], 0
    %8 = vsyncpa [#allocation6], 0
    %s9 = scalar_lea.sflag [#allocation6], 1
    %10 = vsyncpa %s9, 0
    %11 = vsyncpa [#allocation4], 0
    %s12 = scalar_lea.sflag [#allocation4], 1
    %13 = vsyncpa %s12, 0
    loop: start=0, step=1, limit=4
    $region2: #{transposed_linear.1} parent=1 // loop_pre_header
      _
    $region3: #{transposed_linear.1} parent=1 // loop_header
      %s15 = sphi 0, %s19
      %p16 = scmp.ge.s32.totalorder %s15, 4
      %s22 = sphi 0, %s34
      %s23 = sphi 0, %s30
      %s24 = sphi 0, %s22
      %s25 = sphi 0, %s23
      %s26 = sphi 0, %s24
      %s27 = sphi 0, %s25
      %s37 = sphi 0, %s39
      %s40 = sphi 0, %s37
      %s41 = sphi 0, %s40
      %s57 = sphi 0, %s41
      %s63 = sphi 0, %s65
      %s66 = sphi 0, %s63
      %s67 = sphi 0, %s66
      %s83 = sphi 0, %s67
      %s91 = sphi 0, %s93
      %s94 = sphi 0, %s91
      %s95 = sphi 0, %s94
      %s111 = sphi 0, %s95
    $region4: #{transposed_linear.1} parent=1 // loop_header_branch
      %18 = sbr.rel (%p16) target = $region8
    $region5: #{transposed_linear.1} parent=1 // loop_body
      %s20 = ssub.s32 %s15, 1
      %s21 = ssub.s32 %s15, 2
      %s28 = sadd.s32 1, %s23
      %p29 = scmp.ge.s32.totalorder %s28, 2
      %s30 = scalar_select %p29, 0, %s28
      %s31 = sadd.s32 1, %s22
      %s32 = scalar_select %p29, %s31, %s22
      %p33 = scmp.ge.s32.totalorder %s32, 1
      %s34 = scalar_select %p33, 0, %s32
      %s35 = ssub.s32 %s22, %s34
      %p36 = scmp.eq.s32.totalorder %s35, 0
      %s38 = sadd.s32 %s37, 1
      %s39 = scalar_select %p36, %s37, %s38
      %p42 = pneg %p36
      %p43 = scmp.eq.s32.totalorder %s15, 1
      %p44 = por %p42, %p43
      %p45 = scmp.ne.s32.totalorder %s37, %s40
      %p46 = scmp.eq.s32.totalorder %s15, 0
      %p47 = por %p45, %p46
      %p48 = scmp.ne.s32.totalorder %s37, %s40
      %p49 = scmp.eq.s32.totalorder %s20, 1
      %p50 = por %p48, %p49
      %p51 = scmp.ne.s32.totalorder %s40, %s41
      %p52 = scmp.eq.s32.totalorder %s20, 0
      %p53 = por %p51, %p52
      %p54 = scmp.ne.s32.totalorder %s40, %s41
      %p55 = scmp.eq.s32.totalorder %s21, 1
      %p56 = por %p54, %p55
      %p58 = scmp.ne.s32.totalorder %s41, %s57
      %p59 = scmp.eq.s32.totalorder %s21, 0
      %p60 = por %p58, %p59
      %s61 = ssub.s32 %s23, %s30
      %p62 = scmp.eq.s32.totalorder %s61, 0
      %s64 = sadd.s32 %s63, 1
      %s65 = scalar_select %p62, %s63, %s64
      %p68 = pneg %p62
      %p69 = scmp.eq.s32.totalorder %s15, 1
      %p70 = por %p68, %p69
      %p71 = scmp.ne.s32.totalorder %s63, %s66
      %p72 = scmp.eq.s32.totalorder %s15, 0
      %p73 = por %p71, %p72
      %p74 = scmp.ne.s32.totalorder %s63, %s66
      %p75 = scmp.eq.s32.totalorder %s20, 1
      %p76 = por %p74, %p75
      %p77 = scmp.ne.s32.totalorder %s66, %s67
      %p78 = scmp.eq.s32.totalorder %s20, 0
      %p79 = por %p77, %p78
      %p80 = scmp.ne.s32.totalorder %s66, %s67
      %p81 = scmp.eq.s32.totalorder %s21, 1
      %p82 = por %p80, %p81
      %p84 = scmp.ne.s32.totalorder %s67, %s83
      %p85 = scmp.eq.s32.totalorder %s21, 0
      %p86 = por %p84, %p85
      %s87 = ssub.s32 %s22, %s34
      %s88 = ssub.s32 %s23, %s30
      %s89 = sor.u32 %s87, %s88
      %p90 = scmp.eq.s32.totalorder %s89, 0
      %s92 = sadd.s32 %s91, 1
      %s93 = scalar_select %p90, %s91, %s92
      %p96 = pneg %p90
      %p97 = scmp.eq.s32.totalorder %s15, 1
      %p98 = por %p96, %p97
      %p99 = scmp.ne.s32.totalorder %s91, %s94
      %p100 = scmp.eq.s32.totalorder %s15, 0
      %p101 = por %p99, %p100
      %p102 = scmp.ne.s32.totalorder %s91, %s94
      %p103 = scmp.eq.s32.totalorder %s20, 1
      %p104 = por %p102, %p103
      %p105 = scmp.ne.s32.totalorder %s94, %s95
      %p106 = scmp.eq.s32.totalorder %s20, 0
      %p107 = por %p105, %p106
      %p108 = scmp.ne.s32.totalorder %s94, %s95
      %p109 = scmp.eq.s32.totalorder %s21, 1
      %p110 = por %p108, %p109
      %p112 = scmp.ne.s32.totalorder %s95, %s111
      %p113 = scmp.eq.s32.totalorder %s21, 0
      %p114 = por %p112, %p113
      %p115 = scmp.le.s32.totalorder 1, %s15
      %p116 = scmp.lt.s32.totalorder %s15, 3
      %p117 = pnand %p115, %p116
      %p118 = pneg %p117
      // Predicated region
      $region9: #{transposed_linear.1} parent=5 // pred_check
        _
      $region10: #{transposed_linear.1} parent=5 // pred_check_branch
        %120 = sbr.rel (%p117) target = $region12
      $region11: #{transposed_linear.1} parent=5 // pred_region
        %s121 = ssub.s32 %s15, 1
        // Predicated region
        $region13: #{transposed_linear.1} parent=11 // pred_check
          %p122 = pneg %p53
        $region14: #{transposed_linear.1} parent=11 // pred_check_branch
          %124 = sbr.rel (%p122) target = $region16
        $region15: #{transposed_linear.1} parent=11 // pred_region
          %s125 = smul.u32 16, %s24
          %s127 = ssub.s32 2048, 2048
          %128 = vsyncadd [#allocation3], %s127
          %s129 = smul.addr %s125, 128
          %s130 = scalar_lea.hbm %s0, %s129
          %s131 = sshll.u32 [#allocation2], 4
          %s132 = int_to_ptr.vmem [resolvable:$true] %s131
          %137 = dma.hbm_to_vmem [thread:$0]  %s130, 2048, %s132, [#allocation3], 128, 128, 8
        $region16: #{transposed_linear.1} parent=11 // pred_fallthru
          _
      $region12: #{transposed_linear.1} parent=5 // pred_fallthru
        _
      %p138 = scmp.lt.s32.totalorder %s15, 2
      // Predicated region
      $region17: #{transposed_linear.1} parent=5 // pred_check
        %p139 = pneg %p138
      $region18: #{transposed_linear.1} parent=5 // pred_check_branch
        %141 = sbr.rel (%p139) target = $region20
      $region19: #{transposed_linear.1} parent=5 // pred_region
        // Predicated region
        $region21: #{transposed_linear.1} parent=19 // pred_check
          %p142 = pneg %p73
        $region22: #{transposed_linear.1} parent=19 // pred_check_branch
          %144 = sbr.rel (%p142) target = $region24
        $region23: #{transposed_linear.1} parent=19 // pred_region
          %s145 = sand.u32 %s63, 1
          %s146 = scalar_lea.sflag [#allocation6], %s145
          %s147 = sand.u32 %s63, 1
          %s148 = smul.addr %s147, 128
          %s149 = scalar_lea.vmem [#allocation5], %s148
          %s151 = ssub.s32 2048, 2048
          %152 = vsyncadd %s146, %s151
          %s153 = smul.addr %s23, 128
          %s154 = scalar_lea.hbm %s1, %s153
          %s155 = sshll.u32 %s149, 4
          %s156 = int_to_ptr.vmem [resolvable:$true] %s155
          %161 = dma.hbm_to_vmem [thread:$0]  %s154, 2048, %s156, %s146, 256, 128, 8
        $region24: #{transposed_linear.1} parent=19 // pred_fallthru
          _
      $region20: #{transposed_linear.1} parent=5 // pred_fallthru
        _
      %p162 = scmp.le.s32.totalorder 1, %s15
      %p163 = scmp.lt.s32.totalorder %s15, 3
      %p164 = pnand %p162, %p163
      %p165 = pneg %p164
      // Predicated region
      $region25: #{transposed_linear.1} parent=5 // pred_check
        _
      $region26: #{transposed_linear.1} parent=5 // pred_check_branch
        %167 = sbr.rel (%p164) target = $region28
      $region27: #{transposed_linear.1} parent=5 // pred_region
        %s168 = ssub.s32 %s15, 1
        // Predicated region
        $region29: #{transposed_linear.1} parent=27 // pred_check
          %p169 = pneg %p53
        $region30: #{transposed_linear.1} parent=27 // pred_check_branch
          %171 = sbr.rel (%p169) target = $region32
        $region31: #{transposed_linear.1} parent=27 // pred_region
          %172 = dma.done [#allocation3], 2048
        $region32: #{transposed_linear.1} parent=27 // pred_fallthru
          _
        %s173 = sand.u32 %s66, 1
        %s174 = scalar_lea.sflag [#allocation6], %s173
        %s175 = sand.u32 %s66, 1
        %s176 = smul.addr %s175, 128
        %s177 = scalar_lea.vmem [#allocation5], %s176
        // Predicated region
        $region33: #{transposed_linear.1} parent=27 // pred_check
          %p178 = pneg %p79
        $region34: #{transposed_linear.1} parent=27 // pred_check_branch
          %180 = sbr.rel (%p178) target = $region36
        $region35: #{transposed_linear.1} parent=27 // pred_region
          %181 = dma.done %s174, 2048
        $region36: #{transposed_linear.1} parent=27 // pred_fallthru
          _
        %p182 = pneg %p53
        %p183 = pneg %p50
        %s184 = sand.u32 %s66, 1
        %s185 = scalar_lea.sflag [#allocation6], %s184
        %s186 = sand.u32 %s66, 1
        %s187 = smul.addr %s186, 128
        %s188 = scalar_lea.vmem [#allocation5], %s187
        %p189 = pneg %p79
        %p190 = pneg %p76
        %p191 = pneg %p107
        %p192 = pneg %p104
        %s193 = sand.u32 %s94, 1
        %s194 = scalar_lea.sflag [#allocation4], %s193
        %s195 = sand.u32 %s94, 1
        %s196 = smul.addr %s195, 128
        %s197 = scalar_lea.vmem [#allocation7], %s196
        %s198 = smul.u32 16, %s24
        %s199 = smul.u32 16, %s24
        %v201 = vld [vmem:[#allocation2] sm:$0xff]
        %v202 = vld [vmem:[#allocation2 + $0x8] sm:$0xff]
        %v203 = vld [vmem:[#allocation2 + $0x10] sm:$0xff]
        %v204 = vld [vmem:[#allocation2 + $0x18] sm:$0xff]
        %v205 = vld [vmem:[#allocation2 + $0x20] sm:$0xff]
        %v206 = vld [vmem:[#allocation2 + $0x28] sm:$0xff]
        %v207 = vld [vmem:[#allocation2 + $0x30] sm:$0xff]
        %v208 = vld [vmem:[#allocation2 + $0x38] sm:$0xff]
        %v209 = vld [vmem:[#allocation2 + $0x40] sm:$0xff]
        %v210 = vld [vmem:[#allocation2 + $0x48] sm:$0xff]
        %v211 = vld [vmem:[#allocation2 + $0x50] sm:$0xff]
        %v212 = vld [vmem:[#allocation2 + $0x58] sm:$0xff]
        %v213 = vld [vmem:[#allocation2 + $0x60] sm:$0xff]
        %v214 = vld [vmem:[#allocation2 + $0x68] sm:$0xff]
        %v215 = vld [vmem:[#allocation2 + $0x70] sm:$0xff]
        %v216 = vld [vmem:[#allocation2 + $0x78] sm:$0xff]
        %v217 = vld [vmem:[%s177] sm:$0xff]
        %v218 = vld [vmem:[%s177 + $0x8] sm:$0xff]
        %v219 = vld [vmem:[%s177 + $0x10] sm:$0xff]
        %v220 = vld [vmem:[%s177 + $0x18] sm:$0xff]
        %v221 = vld [vmem:[%s177 + $0x20] sm:$0xff]
        %v222 = vld [vmem:[%s177 + $0x28] sm:$0xff]
        %v223 = vld [vmem:[%s177 + $0x30] sm:$0xff]
        %v224 = vld [vmem:[%s177 + $0x38] sm:$0xff]
        %v225 = vld [vmem:[%s177 + $0x40] sm:$0xff]
        %v226 = vld [vmem:[%s177 + $0x48] sm:$0xff]
        %v227 = vld [vmem:[%s177 + $0x50] sm:$0xff]
        %v228 = vld [vmem:[%s177 + $0x58] sm:$0xff]
        %v229 = vld [vmem:[%s177 + $0x60] sm:$0xff]
        %v230 = vld [vmem:[%s177 + $0x68] sm:$0xff]
        %v231 = vld [vmem:[%s177 + $0x70] sm:$0xff]
        %v232 = vld [vmem:[%s177 + $0x78] sm:$0xff]
        %v233 = vpack.c.bf16 %v202, %v201
        %v234 = vpack.c.bf16 %v204, %v203
        %v235 = vpack.c.bf16 %v206, %v205
        %v236 = vpack.c.bf16 %v208, %v207
        %v237 = vpack.c.bf16 %v210, %v209
        %v238 = vpack.c.bf16 %v212, %v211
        %v239 = vpack.c.bf16 %v214, %v213
        %v240 = vpack.c.bf16 %v216, %v215
        %v241 = vpack.c.bf16 %v218, %v217
        %v242 = vpack.c.bf16 %v220, %v219
        %v243 = vpack.c.bf16 %v222, %v221
        %v244 = vpack.c.bf16 %v224, %v223
        %v245 = vpack.c.bf16 %v226, %v225
        %v246 = vpack.c.bf16 %v228, %v227
        %v247 = vpack.c.bf16 %v230, %v229
        %v248 = vpack.c.bf16 %v232, %v231
        %249 = vmatprep.subr.bf16.mxu0 0
        %250 = vmatpush1.bf16.msra.mxu0 %v248
        %251 = vmatprep.subr.bf16.mxu0 0
        %252 = vmatpush1.bf16.msra.mxu0 %v247
        %253 = vmatprep.subr.bf16.mxu0 0
        %254 = vmatpush1.bf16.msra.mxu0 %v246
        %255 = vmatprep.subr.bf16.mxu0 0
        %256 = vmatpush1.bf16.msra.mxu0 %v245
        %257 = vmatprep.subr.bf16.mxu0 0
        %258 = vmatpush1.bf16.msra.mxu0 %v244
        %259 = vmatprep.subr.bf16.mxu0 0
        %260 = vmatpush1.bf16.msra.mxu0 %v243
        %261 = vmatprep.subr.bf16.mxu0 0
        %262 = vmatpush1.bf16.msra.mxu0 %v242
        %263 = vmatprep.subr.bf16.mxu0 0
        %264 = vmatpush1.bf16.msra.mxu0 %v241
        %265 = vmatprep.subr.bf16.mxu0 0
        %266 = vmatpush2.bf16.msra.mxu0 0
        %267 = vmatprep.subr.bf16.mxu0 0
        %268 = vmatpush2.bf16.msra.mxu0 0
        %269 = vmatprep.subr.bf16.mxu0 0
        %270 = vmatpush2.bf16.msra.mxu0 0
        %271 = vmatprep.subr.bf16.mxu0 0
        %272 = vmatpush2.bf16.msra.mxu0 0
        %273 = vmatprep.subr.bf16.mxu0 0
        %274 = vmatpush2.bf16.msra.mxu0 0
        %275 = vmatprep.subr.bf16.mxu0 0
        %276 = vmatpush2.bf16.msra.mxu0 0
        %277 = vmatprep.subr.bf16.mxu0 0
        %278 = vmatpush2.bf16.msra.mxu0 0
        %279 = vmatprep.subr.bf16.mxu0 0
        %280 = vmatpush2.bf16.msra.mxu0 0
        %281 = vmatprep.mubr.bf16.mxu0 0
        %282 = vmatmul.mubr.bf16.gmra.mxu0 %v233
        %v283 = vpop.f32.mrf.mxu0
        %v284 = vadd.f32 0.0, %v283
        %v285 = vpop.f32.mrf.mxu0
        %v286 = vpop.f32.mrf.mxu0
        %v287 = vadd.f32 0.0, %v286
        %v288 = vpop.f32.mrf.mxu0
        %289 = vmatprep.mubr.bf16.mxu0 0
        %290 = vmatmul.mubr.bf16.gmra.mxu0 %v234
        %v291 = vpop.f32.mrf.mxu0
        %v292 = vadd.f32 0.0, %v291
        %v293 = vpop.f32.mrf.mxu0
        %v294 = vpop.f32.mrf.mxu0
        %v295 = vadd.f32 0.0, %v294
        %v296 = vpop.f32.mrf.mxu0
        %297 = vmatprep.mubr.bf16.mxu0 0
        %298 = vmatmul.mubr.bf16.gmra.mxu0 %v235
        %v299 = vpop.f32.mrf.mxu0
        %v300 = vadd.f32 0.0, %v299
        %v301 = vpop.f32.mrf.mxu0
        %v302 = vpop.f32.mrf.mxu0
        %v303 = vadd.f32 0.0, %v302
        %v304 = vpop.f32.mrf.mxu0
        %305 = vmatprep.mubr.bf16.mxu0 0
        %306 = vmatmul.mubr.bf16.gmra.mxu0 %v236
        %v307 = vpop.f32.mrf.mxu0
        %v308 = vadd.f32 0.0, %v307
        %v309 = vpop.f32.mrf.mxu0
        %v310 = vpop.f32.mrf.mxu0
        %v311 = vadd.f32 0.0, %v310
        %v312 = vpop.f32.mrf.mxu0
        %313 = vmatprep.mubr.bf16.mxu0 0
        %314 = vmatmul.mubr.bf16.gmra.mxu0 %v237
        %v315 = vpop.f32.mrf.mxu0
        %v316 = vadd.f32 0.0, %v315
        %v317 = vpop.f32.mrf.mxu0
        %v318 = vpop.f32.mrf.mxu0
        %v319 = vadd.f32 0.0, %v318
        %v320 = vpop.f32.mrf.mxu0
        %321 = vmatprep.mubr.bf16.mxu0 0
        %322 = vmatmul.mubr.bf16.gmra.mxu0 %v238
        %v323 = vpop.f32.mrf.mxu0
        %v324 = vadd.f32 0.0, %v323
        %v325 = vpop.f32.mrf.mxu0
        %v326 = vpop.f32.mrf.mxu0
        %v327 = vadd.f32 0.0, %v326
        %v328 = vpop.f32.mrf.mxu0
        %329 = vmatprep.mubr.bf16.mxu0 0
        %330 = vmatmul.mubr.bf16.gmra.mxu0 %v239
        %v331 = vpop.f32.mrf.mxu0
        %v332 = vadd.f32 0.0, %v331
        %v333 = vpop.f32.mrf.mxu0
        %v334 = vpop.f32.mrf.mxu0
        %v335 = vadd.f32 0.0, %v334
        %v336 = vpop.f32.mrf.mxu0
        %337 = vmatprep.mubr.bf16.mxu0 0
        %338 = vmatmul.mubr.bf16.gmra.mxu0 %v240
        %v339 = vpop.f32.mrf.mxu0
        %v340 = vadd.f32 0.0, %v339
        %v341 = vpop.f32.mrf.mxu0
        %v342 = vpop.f32.mrf.mxu0
        %v343 = vadd.f32 0.0, %v342
        %v344 = vpop.f32.mrf.mxu0
        %345 = vdwg.mxu0
        %346 = vst [vmem:[%s197] sm:$0xff] %v284
        %347 = vst [vmem:[%s197 + $0x8] sm:$0xff] %v287
        %348 = vst [vmem:[%s197 + $0x10] sm:$0xff] %v292
        %349 = vst [vmem:[%s197 + $0x18] sm:$0xff] %v295
        %350 = vst [vmem:[%s197 + $0x20] sm:$0xff] %v300
        %351 = vst [vmem:[%s197 + $0x28] sm:$0xff] %v303
        %352 = vst [vmem:[%s197 + $0x30] sm:$0xff] %v308
        %353 = vst [vmem:[%s197 + $0x38] sm:$0xff] %v311
        %354 = vst [vmem:[%s197 + $0x40] sm:$0xff] %v316
        %355 = vst [vmem:[%s197 + $0x48] sm:$0xff] %v319
        %356 = vst [vmem:[%s197 + $0x50] sm:$0xff] %v324
        %357 = vst [vmem:[%s197 + $0x58] sm:$0xff] %v327
        %358 = vst [vmem:[%s197 + $0x60] sm:$0xff] %v332
        %359 = vst [vmem:[%s197 + $0x68] sm:$0xff] %v335
        %360 = vst [vmem:[%s197 + $0x70] sm:$0xff] %v340
        %361 = vst [vmem:[%s197 + $0x78] sm:$0xff] %v343
        %s362 = sand.u32 %s94, 1
        %s363 = scalar_lea.sflag [#allocation4], %s362
        %s364 = sand.u32 %s94, 1
        %s365 = smul.addr %s364, 128
        %s366 = scalar_lea.vmem [#allocation7], %s365
        // Predicated region
        $region37: #{transposed_linear.1} parent=27 // pred_check
          %p367 = pneg %p104
        $region38: #{transposed_linear.1} parent=27 // pred_check_branch
          %369 = sbr.rel (%p367) target = $region40
        $region39: #{transposed_linear.1} parent=27 // pred_region
          %s370 = smul.u32 16, %s24
          %s372 = ssub.s32 2048, 2048
          %373 = vsyncadd %s363, %s372
          %s374 = smul.addr %s370, 2
          %s375 = sadd.s32 %s25, %s374
          %s376 = smul.addr %s375, 128
          %s377 = scalar_lea.hbm %s2, %s376
          %s378 = sshll.u32 %s366, 4
          %s379 = int_to_ptr.vmem [resolvable:$true] %s378
          %384 = dma.vmem_to_hbm [thread:$0]  %s379, 2048, %s377, %s363, 128, 256, 8
        $region40: #{transposed_linear.1} parent=27 // pred_fallthru
          _
      $region28: #{transposed_linear.1} parent=5 // pred_fallthru
        _
      %p385 = scmp.le.s32.totalorder 2, %s15
      // Predicated region
      $region41: #{transposed_linear.1} parent=5 // pred_check
        %p386 = pneg %p385
      $region42: #{transposed_linear.1} parent=5 // pred_check_branch
        %388 = sbr.rel (%p386) target = $region44
      $region43: #{transposed_linear.1} parent=5 // pred_region
        %s389 = ssub.s32 %s15, 2
        // Predicated region
        $region45: #{transposed_linear.1} parent=43 // pred_check
          %p390 = pneg %p110
        $region46: #{transposed_linear.1} parent=43 // pred_check_branch
          %392 = sbr.rel (%p390) target = $region48
        $region47: #{transposed_linear.1} parent=43 // pred_region
          %s393 = sand.u32 %s95, 1
          %s394 = scalar_lea.sflag [#allocation4], %s393
          %s395 = sand.u32 %s95, 1
          %s396 = smul.addr %s395, 128
          %s397 = scalar_lea.vmem [#allocation7], %s396
          %398 = dma.done %s394, 2048
        $region48: #{transposed_linear.1} parent=43 // pred_fallthru
          _
      $region44: #{transposed_linear.1} parent=5 // pred_fallthru
        _
    $region6: #{transposed_linear.1} parent=1 // loop_footer
      %s19 = sadd.s32 1, %s15
    $region7: #{transposed_linear.1} parent=1 // loop_footer_branch
      %14 = sbr.rel target = $region3
    $region8: #{transposed_linear.1} parent=1 // loop_exit
      _
    %399 = vsyncpa [#allocation3], 1
    %s400 = scalar_lea.sflag [#allocation3], 1
    %401 = vsyncpa %s400, 1
    %402 = vsyncpa [#allocation6], 1
    %s403 = scalar_lea.sflag [#allocation6], 1
    %404 = vsyncpa %s403, 1
    %405 = vsyncpa [#allocation4], 1
    %s406 = scalar_lea.sflag [#allocation4], 1
    %407 = vsyncpa %s406, 1

</llo_original>
